<compile_context>
chip_gen: v7x
topology: tpu7x:2x2x1
jax: 0.10.0
libtpu: 0.0.40
codegen_flags: <defaults>
</compile_context>

<pallas_src>
import math

import jax
import jax.numpy as jnp
from jax.experimental import pallas as pl
from jax.experimental.pallas import tpu as pltpu


# ---------------------------------------------------------------- kernels ---

def _bias_add_3d_kernel(bias_ref, x_ref, o_ref):
    # bias_ref: (BC, 1) channel-bias slice; x_ref/o_ref: (BN, BC, BT) tile.
    b = bias_ref[...].astype(x_ref.dtype)        # cast once per block (hoisted)
    o_ref[...] = x_ref[...] + b[None, :, :]      # pure per-lane VPU add


def _bias_add_2d_kernel(bias_ref, x_ref, o_ref):
    # bias_ref: (1, BM) pre-broadcast bias row; x_ref/o_ref: (BL, BM) tile.
    o_ref[...] = x_ref[...] + bias_ref[...].astype(x_ref.dtype)


# ---------------------------------------------------------------- helpers ---

def _prod(xs):
    out = 1
    for v in xs:
        out *= int(v)
    return out


def _cdiv(a, b):
    return -(-a // b)


def _hw_params():
    """Return (vmem_limit_bytes, block_budget_bytes), generation aware."""
    try:
        cap = int(pltpu.get_tpu_info().vmem_capacity_bytes)
    except Exception:
        cap = 128 << 20
    if cap >= (96 << 20):            # v5e / v6e: 128 MiB physical VMEM
        return 64 << 20, 8 << 20
    return 48 << 20, 4 << 20         # v7x: 64 MiB physical -> keep headroom


def _tiles_3d(L, C, T, itemsize, budget_bytes):
    """Pick (BN, BC, BT) for the (L, C, T) layout (T >= 128)."""
    sub = 8 * max(1, 4 // itemsize)              # dtype-packed sublane multiple
    budget = max(1, budget_bytes // itemsize)    # elements per block
    min_c = C if C < sub else sub                # smallest legal channel tile

    if min_c * T <= budget:
        BT = T
        if C <= sub:
            BC = C
        else:
            BC = min(C, max(sub, ((budget // T) // sub) * sub))
    else:
        # even a minimal channel group with full T overflows -> tile the lane
        # axis in multiples of 128 (block stays within budget)
        BT = min(T, max(128, ((budget // min_c) // 128) * 128))
        BC = min_c
    BN = max(1, min(L, budget // (BC * BT)))

    # >1 MiB tensors: keep >= ~4 grid steps so both v7x TCs get work and the
    # pipeline has input/output DMA to overlap with compute.
    if L * C * T * itemsize > (1 << 20):
        for _ in range(16):
            if _cdiv(L, BN) * _cdiv(C, BC) * _cdiv(T, BT) >= 4:
                break
            if BN > 1:
                BN = _cdiv(BN, 2)
            elif BT >= 256:
                BT = max(128, ((BT // 2) // 128) * 128)
            elif BC > sub:
                BC = max(sub, ((BC // 2) // sub) * sub)
            else:
                break
    return BN, BC, BT


def _tiles_2d(L, M, itemsize, budget_bytes):
    """Pick (BL, BM) for the folded (L, M = C*T) layout (small-T path)."""
    sub = 8 * max(1, 4 // itemsize)
    budget = max(1, budget_bytes // itemsize)
    min_l = L if L < 8 else 8

    if M < 128 or min_l * M <= budget:
        BM = M
    else:
        BM = min(M, max(128, ((budget // min_l) // 128) * 128))

    rows = max(1, budget // BM)
    if rows >= L:
        BL = L
    else:
        BL = (rows // sub) * sub
        if BL == 0:
            BL = (rows // 8) * 8
        if BL == 0:
            BL = min(8, L)                       # 8-sublane block, or full L

    if L * M * itemsize > (1 << 20):
        for _ in range(16):
            if _cdiv(L, BL) * _cdiv(M, BM) >= 4:
                break
            if BL > 8:
                BL = max(8, ((BL // 2) // 8) * 8)
            elif BM >= 256:
                BM = max(128, ((BM // 2) // 128) * 128)
            else:
                break
    return BL, BM


# ---------------------------------------------------------------- wrapper ---

def bias_forward(x: jax.Array, bias: jax.Array, bias_add_dim: int = 1,
                 *, donate_x: bool = False,
                 block_budget_bytes: int | None = None) -> jax.Array:
    """x + bias broadcast along `bias_add_dim` (matches Bias.forward)."""
    ndim = x.ndim
    dim = bias_add_dim % ndim
    C = int(x.shape[dim])
    assert bias.shape == (C,), f"bias shape {bias.shape} != ({C},)"

    vmem_limit, auto_budget = _hw_params()
    budget = block_budget_bytes or auto_budget

    L = _prod(x.shape[:dim])           # collapsed leading (batch-like) dims
    T = _prod(x.shape[dim + 1:])       # collapsed trailing (spatial) dims
    itemsize = jnp.dtype(x.dtype).itemsize

    # x is input index 1 (bias is 0); aliasing only avoids a 2nd HBM buffer.
    io_aliases = {1: 0} if donate_x else {}

    if T >= 128:
        # ---------------- lane-dense 3-D path (NCHW-like) ----------------
        # NOTE: the reshape is a free view only for contiguous layouts; for
        # permuted inputs XLA materializes a copy (extra HBM traffic only).
        x3 = x.reshape(L, C, T)
        b2 = bias.reshape(C, 1)
        BN, BC, BT = _tiles_3d(L, C, T, itemsize, budget)
        grid = (_cdiv(C, BC), _cdiv(L, BN), _cdiv(T, BT))  # channel outermost

        out = pl.pallas_call(
            _bias_add_3d_kernel,
            out_shape=jax.ShapeDtypeStruct((L, C, T), x.dtype),
            grid_spec=pltpu.PrefetchScalarGridSpec(
                num_scalar_prefetch=0,
                grid=grid,
                in_specs=[
                    # bias block index constant across inner (n, t) steps
                    pl.BlockSpec((BC, 1), lambda c, n, t: (c, 0)),
                    pl.BlockSpec((BN, BC, BT), lambda c, n, t: (n, c, t)),
                ],
                out_specs=pl.BlockSpec((BN, BC, BT), lambda c, n, t: (n, c, t)),
            ),
            compiler_params=pltpu.CompilerParams(
                dimension_semantics=("parallel", "parallel", "parallel"),
                vmem_limit_bytes=vmem_limit,
            ),
            input_output_aliases=io_aliases,
        )(b2, x3)
        return out.reshape(x.shape)

    # ---------------- small-T path: fold channels into the lane axis -------
    # T < 128 would make stores masked partials; instead view x as (L, C*T)
    # and pre-broadcast bias to a (1, C*T) row (tiny wrapper-side op).
    M = C * T
    x2 = x.reshape(L, M)
    b_row = jnp.broadcast_to(bias.reshape(C, 1).astype(x.dtype), (C, T)).reshape(1, M)
    BL, BM = _tiles_2d(L, M, itemsize, budget)
    grid = (_cdiv(M, BM), _cdiv(L, BL))           # lane axis outermost

    out = pl.pallas_call(
        _bias_add_2d_kernel,
        out_shape=jax.ShapeDtypeStruct((L, M), x.dtype),
        grid_spec=pltpu.PrefetchScalarGridSpec(
            num_scalar_prefetch=0,
            grid=grid,
            in_specs=[
                pl.BlockSpec((1, BM), lambda m, n: (0, m)),
                pl.BlockSpec((BL, BM), lambda m, n: (n, m)),
            ],
            out_specs=pl.BlockSpec((BL, BM), lambda m, n: (n, m)),
        ),
        compiler_params=pltpu.CompilerParams(
            dimension_semantics=("parallel", "parallel"),
            vmem_limit_bytes=vmem_limit,
        ),
        input_output_aliases=io_aliases,
    )(b_row, x2)
    return out.reshape(x.shape)


# ------------------------------------------------------------------ demo ----

if __name__ == "__main__":
    key = jax.random.PRNGKey(0)
    kx, kb, kx2, kb2 = jax.random.split(key, 4)

    # 1) Small NCHW conv-activation shape (default bias_add_dim=1, 3-D path).
    N, C, H, W = 2, 4, 16, 16
    x = jax.random.normal(kx, (N, C, H, W), dtype=jnp.float32)
    # Deterministic init mirroring `initializer='uniform'`: U(-b, b), b=1/sqrt(size)
    bound = 1.0 / math.sqrt(C)
    bias = jax.random.uniform(kb, (C,), dtype=jnp.float32,
                              minval=-bound, maxval=bound)
    out = jax.block_until_ready(bias_forward(x, bias, bias_add_dim=1))
    ref = x + bias.astype(x.dtype).reshape(1, C, 1, 1)
    assert out.shape == x.shape and out.dtype == x.dtype
    assert jnp.allclose(out, ref, atol=1e-6, rtol=1e-6)

    # 2) Channel-last style (bias on the last dim -> small-T / folded path).
    B2, S2, D2 = 2, 3, 160
    x2 = jax.random.normal(kx2, (B2, S2, D2), dtype=jnp.float32)
    bound2 = 1.0 / math.sqrt(D2)
    bias2 = jax.random.uniform(kb2, (D2,), dtype=jnp.float32,
                               minval=-bound2, maxval=bound2)
    out2 = jax.block_until_ready(bias_forward(x2, bias2, bias_add_dim=2))
    ref2 = x2 + bias2.astype(x2.dtype).reshape(1, 1, D2)
    assert out2.shape == x2.shape and out2.dtype == x2.dtype
    assert jnp.allclose(out2, ref2, atol=1e-6, rtol=1e-6)

    print("KERNEL_OK")
</pallas_src>

<mosaic_0001>
module attributes {stable_mosaic.version = 11 : i64} {
  func.func @_bias_add_3d_kernel(%arg0: i32, %arg1: i32, %arg2: i32, %arg3: memref<4x1xf32, #tpu.memory_space<vmem>>, %arg4: memref<2x4x256xf32, #tpu.memory_space<vmem>>, %arg5: memref<2x4x256xf32, #tpu.memory_space<vmem>>) attributes {dimension_semantics = [#tpu.dimension_semantics<parallel>, #tpu.dimension_semantics<parallel>, #tpu.dimension_semantics<parallel>], iteration_bounds = array<i64: 1, 1, 1>, scalar_prefetch = 0 : i64, scratch_operands = 0 : i64, tpu.core_type = #tpu.core_type<tc>, window_params = [{transform_indices = @transform_0, window_bounds = array<i64: 4, 1>}, {transform_indices = @transform_1, window_bounds = array<i64: 2, 4, 256>}, {transform_indices = @transform_2, window_bounds = array<i64: 2, 4, 256>}]} {
    %c0 = arith.constant 0 : index
    %c0_0 = arith.constant 0 : index
    %0 = vector.load %arg3[%c0, %c0_0] : memref<4x1xf32, #tpu.memory_space<vmem>>, vector<4x1xf32>
    %c0_1 = arith.constant 0 : index
    %c0_2 = arith.constant 0 : index
    %c0_3 = arith.constant 0 : index
    %1 = vector.load %arg4[%c0_1, %c0_2, %c0_3] : memref<2x4x256xf32, #tpu.memory_space<vmem>>, vector<2x4x256xf32>
    %2 = vector.shape_cast %0 : vector<4x1xf32> to vector<1x4x1xf32>
    %3 = vector.broadcast %2 : vector<1x4x1xf32> to vector<2x4x256xf32>
    %4 = arith.addf %1, %3 : vector<2x4x256xf32>
    %c0_4 = arith.constant 0 : index
    %c0_5 = arith.constant 0 : index
    %c0_6 = arith.constant 0 : index
    %5 = vector.load %arg5[%c0_4, %c0_5, %c0_6] : memref<2x4x256xf32, #tpu.memory_space<vmem>>, vector<2x4x256xf32>
    tpu.vector_store %arg5[%c0_4, %c0_5, %c0_6], %4 {strides = array<i32>} : memref<2x4x256xf32, #tpu.memory_space<vmem>>, vector<2x4x256xf32>,
    return
  }
  func.func @transform_0(%arg0: i32, %arg1: i32, %arg2: i32) -> (i32, i32) {
    %c0_i32 = arith.constant 0 : i32
    %c0_i32_0 = arith.constant 0 : i32
    return %arg0, %c0_i32 : i32, i32
  }
  func.func @transform_1(%arg0: i32, %arg1: i32, %arg2: i32) -> (i32, i32, i32) {
    %c0_i32 = arith.constant 0 : i32
    return %arg1, %arg0, %arg2 : i32, i32, i32
  }
  func.func @transform_2(%arg0: i32, %arg1: i32, %arg2: i32) -> (i32, i32, i32) {
    %c0_i32 = arith.constant 0 : i32
    return %arg1, %arg0, %arg2 : i32, i32, i32
  }
}

</mosaic_0001>

<llo_original>
// kernel: tpu_custom_call.1
$region0: #{tpu_custom_call.1}
  #allocation0 [shape = 'u32[]', space=smem, size = 0x4, offset = 0x4, fixed_abs, tag = 'smem constant byte address 0x4 - core index']
  #allocation1 [shape = 'u32[144,128]{1,0:T(1,128)}', space=vmem, size = 0x12000, scoped, tag = 'internal scratch']
  %s0 = inlined_call_operand.hbm [shape: f32[4,1], index: 0, kind: input, shape index: {}]
  %s1 = inlined_call_operand.hbm [shape: f32[2,4,256], index: 1, kind: input, shape index: {}]
  %s2 = inlined_call_operand.hbm [shape: f32[2,4,256], index: 2, kind: output, shape index: {}]
  %s3 = sld [smem:[#allocation0]]
  $region26: #{tpu_custom_call.1} parent=0
    _
  %s5 = ssub.s32 1, %s3
  %s6 = scalar_select 0, %s5, %s3
  $region1: #{tpu_custom_call.1} parent=0
    #allocation2 [shape = 'u8[2048]{0}', space=vmem, size = 0x800, scoped, tag = 'input window, operand 0, single buffered']
    #allocation3 [shape = 's32[1]{0}', space=sflag, size = 0x4, scoped, tag = 'scoped memory for tpu_custom_call.1']
    #allocation4 [shape = 's32[1]{0}', space=sflag, size = 0x4, scoped, tag = 'scoped memory for tpu_custom_call.1']
    #allocation5 [shape = 'u8[8192]{0}', space=vmem, size = 0x2000, scoped, tag = 'input window, operand 1, single buffered']
    #allocation6 [shape = 's32[1]{0}', space=sflag, size = 0x4, scoped, tag = 'scoped memory for tpu_custom_call.1']
    #allocation7 [shape = 'u8[8192]{0}', space=vmem, size = 0x2000, scoped, tag = 'output window, operand 0, single buffered']
    %7 = vsyncpa [#allocation3], 0
    %8 = vsyncpa [#allocation6], 0
    %9 = vsyncpa [#allocation4], 0
    // Predicated region
    $region2: #{tpu_custom_call.1} parent=1 // pred_check
      _
    $region3: #{tpu_custom_call.1} parent=1 // pred_check_branch
      %11 = sbr.rel (0) target = $region5
    $region4: #{tpu_custom_call.1} parent=1 // pred_region
      %s13 = ssub.s32 64, 64
      %14 = vsyncadd [#allocation3], %s13
      %s16 = sshll.u32 [#allocation2], 4
      %s17 = int_to_ptr.vmem [resolvable:$true] %s16
      %19 = dma.hbm_to_vmem [thread:$0]  %s0, 64, %s17, [#allocation3]
    $region5: #{tpu_custom_call.1} parent=1 // pred_fallthru
      _
    // Predicated region
    $region6: #{tpu_custom_call.1} parent=1 // pred_check
      _
    $region7: #{tpu_custom_call.1} parent=1 // pred_check_branch
      %21 = sbr.rel (0) target = $region9
    $region8: #{tpu_custom_call.1} parent=1 // pred_region
      %s23 = ssub.s32 256, 256
      %24 = vsyncadd [#allocation6], %s23
      %s25 = sshll.u32 [#allocation5], 4
      %s26 = int_to_ptr.vmem [resolvable:$true] %s25
      %31 = dma.hbm_to_vmem [thread:$0]  %s1, 256, %s26, [#allocation6], 128, 128, 8
    $region9: #{tpu_custom_call.1} parent=1 // pred_fallthru
      _
    // Predicated region
    $region10: #{tpu_custom_call.1} parent=1 // pred_check
      _
    $region11: #{tpu_custom_call.1} parent=1 // pred_check_branch
      %33 = sbr.rel (0) target = $region13
    $region12: #{tpu_custom_call.1} parent=1 // pred_region
      %34 = dma.done [#allocation3], 64
    $region13: #{tpu_custom_call.1} parent=1 // pred_fallthru
      _
    // Predicated region
    $region14: #{tpu_custom_call.1} parent=1 // pred_check
      _
    $region15: #{tpu_custom_call.1} parent=1 // pred_check_branch
      %36 = sbr.rel (0) target = $region17
    $region16: #{tpu_custom_call.1} parent=1 // pred_region
      %37 = dma.done [#allocation6], 256
    $region17: #{tpu_custom_call.1} parent=1 // pred_fallthru
      _
    %v38 = vld [vmem:[#allocation2] sm:$0xf]
    %v39 = vld [vmem:[#allocation5] sm:$0xff]
    %v40 = vld [vmem:[#allocation5 + $0x8] sm:$0xff]
    %42 = vset.pattern.permute.xlu0 0
    %43 = vperm.xlu0 %42, %v38
    %v44 = vpop.permute.xlu0 %43
    %v46 = vunpack.c.l.s4 839922192
    %v47 = vunpack.c.0.s8 %v46
    %v48 = vlaneseq
    %v49 = vshrl.u32 %v48, 7
    %v50 = vsub.s32 %v47, %v49
    %v51 = vrot.slane %v44, %v50
    %v53 = vadd.f32 %v39, %v51
    %v54 = vadd.f32 %v40, %v51
    %55 = vst [vmem:[#allocation7] sm:$0xff] %v53
    %56 = vst [vmem:[#allocation7 + $0x8] sm:$0xff] %v54
    // Predicated region
    $region18: #{tpu_custom_call.1} parent=1 // pred_check
      _
    $region19: #{tpu_custom_call.1} parent=1 // pred_check_branch
      %58 = sbr.rel (0) target = $region21
    $region20: #{tpu_custom_call.1} parent=1 // pred_region
      %s60 = ssub.s32 256, 256
      %61 = vsyncadd [#allocation4], %s60
      %s62 = sshll.u32 [#allocation7], 4
      %s63 = int_to_ptr.vmem [resolvable:$true] %s62
      %68 = dma.vmem_to_hbm [thread:$0]  %s63, 256, %s2, [#allocation4], 128, 128, 8
    $region21: #{tpu_custom_call.1} parent=1 // pred_fallthru
      _
    // Predicated region
    $region22: #{tpu_custom_call.1} parent=1 // pred_check
      _
    $region23: #{tpu_custom_call.1} parent=1 // pred_check_branch
      %70 = sbr.rel (0) target = $region25
    $region24: #{tpu_custom_call.1} parent=1 // pred_region
      %71 = dma.done [#allocation4], 256
    $region25: #{tpu_custom_call.1} parent=1 // pred_fallthru
      _
    %72 = vsyncpa [#allocation3], 1
    %73 = vsyncpa [#allocation6], 1
    %74 = vsyncpa [#allocation4], 1

</llo_original>
